<compile_context>
chip_gen: v7x
topology: tpu7x:2x2x1
jax: 0.10.0
libtpu: 0.0.40
codegen_flags: <defaults>
</compile_context>

<pallas_src>
import functools

import jax
import jax.numpy as jnp
from jax.experimental import pallas as pl
from jax.experimental.pallas import tpu as pltpu


def _se_kernel(x_ref, w1t_ref, w2_ref, o_ref, *, inv_hw):
    # x_ref:   (Nb, C, HWp) block; channels on sublanes, spatial on lanes
    # w1t_ref: (C, Cr) = W1.T   (first Linear; PyTorch weight is (Cr, C))
    # w2_ref:  (C, Cr) = W2     (second Linear; PyTorch weight is (C, Cr))
    # o_ref:   (Nb, C, HWp)
    # Pass 1 (squeeze): stream the block once, reduce over the spatial lanes.
    x0 = x_ref[...].astype(jnp.float32)                               # (Nb, C, HWp)
    mean = jnp.sum(x0, axis=2, keepdims=True) * inv_hw                # (Nb, C, 1)

    w1t = w1t_ref[...]                                                # (C, Cr)
    w2 = w2_ref[...]                                                  # (C, Cr)

    # Excitation FC1 + ReLU:  hidden[n, j] = relu( sum_c mean[n, c] * W1[j, c] )
    # Kept on VPU/XLU (broadcast-mul + reductions) -- not a degenerate MXU matmul.
    hidden = jnp.sum(mean * w1t[None, :, :], axis=1, keepdims=True)   # (Nb, 1, Cr)
    hidden = jnp.maximum(hidden, 0.0)

    # Excitation FC2 + hard-sigmoid: gate[n, c] = relu6(sum_j W2[c,j]*h[n,j] + 3)/6
    gate = jnp.sum(hidden * w2[None, :, :], axis=2, keepdims=True)    # (Nb, C, 1)
    gate = jnp.clip(gate + 3.0, 0.0, 6.0) * (1.0 / 6.0)

    # Pass 2 (scale): re-read the block so the tile is not held live across
    # both passes (avoids vreg spills at MiB-scale blocks), then store in the
    # input dtype with full-lane unmasked vst.
    x1 = x_ref[...].astype(jnp.float32)
    o_ref[...] = (x1 * gate).astype(o_ref.dtype)


def _pick_block_batch(n, c, hw, itemsize, target_bytes=1 << 20, min_steps=8):
    """Batch-tile size: ~target_bytes per block, divisor of n, >=min_steps when possible."""
    per_sample = max(1, c * hw * itemsize)
    nb = max(1, min(n, target_bytes // per_sample))
    if n >= min_steps:
        # keep enough grid steps for the software pipeline / megacore sharding
        nb = max(1, min(nb, n // min_steps))
    while n % nb != 0:           # prefer full blocks on every grid step
        nb -= 1
    return nb


def se_module_pallas(x_nchw, w1, w2):
    """SEModule forward. x_nchw: (N, C, H, W); w1: (C//r, C); w2: (C, C//r)."""
    N, C, H, W = x_nchw.shape
    Cr = w1.shape[0]
    assert w1.shape == (Cr, C) and w2.shape == (C, Cr)
    HW = H * W

    # Free contiguous reshape (NCHW is already laid out as N, C, H*W).
    # No dtype cast here: the cast happens in-register inside the kernel.
    x_flat = x_nchw.reshape(N, C, HW)

    # Keep the output store lane-dense: pad the spatial axis to a multiple of
    # 128 (zero pad does not change the mean, which divides by the true H*W).
    HWp = pl.cdiv(HW, 128) * 128
    if HWp != HW:
        x_flat = jnp.pad(x_flat, ((0, 0), (0, 0), (0, HWp - HW)))

    itemsize = jnp.dtype(x_flat.dtype).itemsize
    Nb = _pick_block_batch(N, C, HWp, itemsize)
    grid = (N // Nb,)

    # Weights are tiny; cast once in the wrapper.
    w1t = jnp.transpose(w1).astype(jnp.float32)   # (C, Cr)
    w2f = w2.astype(jnp.float32)                  # (C, Cr)

    cost = pl.CostEstimate(
        flops=2 * N * C * HW + 4 * N * C * Cr,
        transcendentals=0,
        bytes_accessed=2 * N * C * HWp * itemsize + 2 * 4 * C * Cr,
    )

    out = pl.pallas_call(
        functools.partial(_se_kernel, inv_hw=1.0 / HW),
        out_shape=jax.ShapeDtypeStruct((N, C, HWp), x_flat.dtype),
        grid_spec=pltpu.PrefetchScalarGridSpec(
            num_scalar_prefetch=0,
            grid=grid,
            in_specs=[
                pl.BlockSpec((Nb, C, HWp), lambda b: (b, 0, 0)),
                pl.BlockSpec((C, Cr), lambda b: (0, 0)),
                pl.BlockSpec((C, Cr), lambda b: (0, 0)),
            ],
            out_specs=pl.BlockSpec((Nb, C, HWp), lambda b: (b, 0, 0)),
        ),
        compiler_params=pltpu.CompilerParams(
            dimension_semantics=("parallel",)),
        cost_estimate=cost,
    )(x_flat, w1t, w2f)

    if HWp != HW:
        out = out[:, :, :HW]
    return out.reshape(N, C, H, W)


def _reference(x, w1, w2):
    """Pure-JAX SEModule forward (matches the PyTorch module in eval mode)."""
    mean = jnp.mean(x, axis=(2, 3))                               # (N, C)
    hidden = jnp.maximum(mean @ w1.T, 0.0)                        # (N, Cr)
    gate = jnp.clip(hidden @ w2.T + 3.0, 0.0, 6.0) / 6.0          # (N, C)
    return x * gate[:, :, None, None]


if __name__ == "__main__":
    # Small shapes consistent with SEModule(in_channels=16, reduction=4).
    N, C, H, W = 4, 16, 16, 16
    reduction = 4
    Cr = C // reduction

    key = jax.random.PRNGKey(0)
    k_x, k_w1, k_w2 = jax.random.split(key, 3)

    x = jax.random.normal(k_x, (N, C, H, W), jnp.float32)
    w1 = jax.random.normal(k_w1, (Cr, C), jnp.float32) * 0.3   # Linear(C -> Cr), no bias
    w2 = jax.random.normal(k_w2, (C, Cr), jnp.float32) * 0.3   # Linear(Cr -> C), no bias

    # f32 path
    out = se_module_pallas(x, w1, w2)
    out = jax.block_until_ready(out)
    ref = _reference(x, w1, w2)
    assert out.shape == (N, C, H, W)
    assert out.dtype == x.dtype
    assert jnp.allclose(out, ref, atol=1e-5, rtol=1e-5), "f32 mismatch vs reference"

    # bf16 I/O path (math stays f32 in-kernel; loads/stores are bf16)
    x_b = x.astype(jnp.bfloat16)
    out_b = se_module_pallas(x_b, w1, w2)
    out_b = jax.block_until_ready(out_b)
    ref_b = _reference(x_b.astype(jnp.float32), w1, w2)
    assert out_b.dtype == jnp.bfloat16
    assert jnp.allclose(out_b.astype(jnp.float32), ref_b, atol=1e-1, rtol=1e-1), \
        "bf16 mismatch vs reference"

    print("KERNEL_OK")
</pallas_src>

<mosaic_0001>
module attributes {stable_mosaic.version = 11 : i64} {
  func.func @_se_kernel(%arg0: i32, %arg1: memref<4x16x256xf32, #tpu.memory_space<vmem>>, %arg2: memref<16x4xf32, #tpu.memory_space<vmem>>, %arg3: memref<16x4xf32, #tpu.memory_space<vmem>>, %arg4: memref<4x16x256xf32, #tpu.memory_space<vmem>>) attributes {dimension_semantics = [#tpu.dimension_semantics<parallel>], iteration_bounds = array<i64: 1>, scalar_prefetch = 0 : i64, scratch_operands = 0 : i64, tpu.core_type = #tpu.core_type<tc>, window_params = [{transform_indices = @transform_0, window_bounds = array<i64: 4, 16, 256>}, {pipeline_mode = #tpu.pipeline_mode<synchronous>, transform_indices = @transform_1, window_bounds = array<i64: 16, 4>}, {pipeline_mode = #tpu.pipeline_mode<synchronous>, transform_indices = @transform_2, window_bounds = array<i64: 16, 4>}, {transform_indices = @transform_3, window_bounds = array<i64: 4, 16, 256>}]} {
    %c0 = arith.constant 0 : index
    %c0_0 = arith.constant 0 : index
    %c0_1 = arith.constant 0 : index
    %0 = vector.load %arg1[%c0, %c0_0, %c0_1] : memref<4x16x256xf32, #tpu.memory_space<vmem>>, vector<4x16x256xf32>
    %cst = arith.constant dense<0.000000e+00> : vector<4x16xf32>
    %1 = vector.multi_reduction <add>, %0, %cst [2] : vector<4x16x256xf32> to vector<4x16xf32>
    %2 = vector.shape_cast %1 : vector<4x16xf32> to vector<4x16x1xf32>
    %cst_2 = arith.constant 3.906250e-03 : f32
    %3 = vector.broadcast %cst_2 : f32 to vector<4x16x1xf32>
    %4 = arith.mulf %2, %3 : vector<4x16x1xf32>
    %c0_3 = arith.constant 0 : index
    %c0_4 = arith.constant 0 : index
    %5 = vector.load %arg2[%c0_3, %c0_4] : memref<16x4xf32, #tpu.memory_space<vmem>>, vector<16x4xf32>
    %c0_5 = arith.constant 0 : index
    %c0_6 = arith.constant 0 : index
    %6 = vector.load %arg3[%c0_5, %c0_6] : memref<16x4xf32, #tpu.memory_space<vmem>>, vector<16x4xf32>
    %7 = vector.shape_cast %5 : vector<16x4xf32> to vector<1x16x4xf32>
    %8 = vector.broadcast %4 : vector<4x16x1xf32> to vector<4x16x4xf32>
    %9 = vector.broadcast %7 : vector<1x16x4xf32> to vector<4x16x4xf32>
    %10 = arith.mulf %8, %9 : vector<4x16x4xf32>
    %cst_7 = arith.constant dense<0.000000e+00> : vector<4x4xf32>
    %11 = vector.multi_reduction <add>, %10, %cst_7 [1] : vector<4x16x4xf32> to vector<4x4xf32>
    %12 = vector.shape_cast %11 : vector<4x4xf32> to vector<4x1x4xf32>
    %cst_8 = arith.constant 0.000000e+00 : f32
    %13 = vector.broadcast %cst_8 : f32 to vector<4x1x4xf32>
    %14 = arith.maximumf %12, %13 : vector<4x1x4xf32>
    %15 = vector.shape_cast %6 : vector<16x4xf32> to vector<1x16x4xf32>
    %16 = vector.broadcast %14 : vector<4x1x4xf32> to vector<4x16x4xf32>
    %17 = vector.broadcast %15 : vector<1x16x4xf32> to vector<4x16x4xf32>
    %18 = arith.mulf %16, %17 : vector<4x16x4xf32>
    %cst_9 = arith.constant dense<0.000000e+00> : vector<4x16xf32>
    %19 = vector.multi_reduction <add>, %18, %cst_9 [2] : vector<4x16x4xf32> to vector<4x16xf32>
    %20 = vector.shape_cast %19 : vector<4x16xf32> to vector<4x16x1xf32>
    %cst_10 = arith.constant 3.000000e+00 : f32
    %21 = vector.broadcast %cst_10 : f32 to vector<4x16x1xf32>
    %22 = arith.addf %20, %21 : vector<4x16x1xf32>
    %cst_11 = arith.constant 0.000000e+00 : f32
    %cst_12 = arith.constant 6.000000e+00 : f32
    %23 = vector.broadcast %cst_11 : f32 to vector<4x16x1xf32>
    %24 = arith.maximumf %23, %22 : vector<4x16x1xf32>
    %25 = vector.broadcast %cst_12 : f32 to vector<4x16x1xf32>
    %26 = arith.minimumf %25, %24 : vector<4x16x1xf32>
    %cst_13 = arith.constant 0.166666672 : f32
    %27 = vector.broadcast %cst_13 : f32 to vector<4x16x1xf32>
    %28 = arith.mulf %26, %27 : vector<4x16x1xf32>
    %c0_14 = arith.constant 0 : index
    %c0_15 = arith.constant 0 : index
    %c0_16 = arith.constant 0 : index
    %29 = vector.load %arg1[%c0_14, %c0_15, %c0_16] : memref<4x16x256xf32, #tpu.memory_space<vmem>>, vector<4x16x256xf32>
    %30 = vector.broadcast %28 : vector<4x16x1xf32> to vector<4x16x256xf32>
    %31 = arith.mulf %29, %30 : vector<4x16x256xf32>
    %c0_17 = arith.constant 0 : index
    %c0_18 = arith.constant 0 : index
    %c0_19 = arith.constant 0 : index
    %32 = vector.load %arg4[%c0_17, %c0_18, %c0_19] : memref<4x16x256xf32, #tpu.memory_space<vmem>>, vector<4x16x256xf32>
    tpu.vector_store %arg4[%c0_17, %c0_18, %c0_19], %31 {strides = array<i32>} : memref<4x16x256xf32, #tpu.memory_space<vmem>>, vector<4x16x256xf32>,
    return
  }
  func.func @transform_0(%arg0: i32) -> (i32, i32, i32) {
    %c0_i32 = arith.constant 0 : i32
    %c0_i32_0 = arith.constant 0 : i32
    %c0_i32_1 = arith.constant 0 : i32
    return %arg0, %c0_i32, %c0_i32_0 : i32, i32, i32
  }
  func.func @transform_1(%arg0: i32) -> (i32, i32) {
    %c0_i32 = arith.constant 0 : i32
    %c0_i32_0 = arith.constant 0 : i32
    %c0_i32_1 = arith.constant 0 : i32
    return %c0_i32, %c0_i32_0 : i32, i32
  }
  func.func @transform_2(%arg0: i32) -> (i32, i32) {
    %c0_i32 = arith.constant 0 : i32
    %c0_i32_0 = arith.constant 0 : i32
    %c0_i32_1 = arith.constant 0 : i32
    return %c0_i32, %c0_i32_0 : i32, i32
  }
  func.func @transform_3(%arg0: i32) -> (i32, i32, i32) {
    %c0_i32 = arith.constant 0 : i32
    %c0_i32_0 = arith.constant 0 : i32
    %c0_i32_1 = arith.constant 0 : i32
    return %arg0, %c0_i32, %c0_i32_0 : i32, i32, i32
  }
}

</mosaic_0001>

<llo_original>
// kernel: tpu_custom_call.1
$region0: #{tpu_custom_call.1}
  #allocation0 [shape = 'u32[]', space=smem, size = 0x4, offset = 0x4, fixed_abs, tag = 'smem constant byte address 0x4 - core index']
  #allocation1 [shape = 'u32[144,128]{1,0:T(1,128)}', space=vmem, size = 0x12000, scoped, tag = 'internal scratch']
  %s0 = inlined_call_operand.hbm [shape: f32[4,16,256], index: 0, kind: input, shape index: {}]
  %s1 = inlined_call_operand.vmem [shape: f32[16,4], index: 1, kind: input, shape index: {}]
  %s2 = inlined_call_operand.vmem [shape: f32[16,4], index: 2, kind: input, shape index: {}]
  %s3 = inlined_call_operand.hbm [shape: f32[4,16,256], index: 3, kind: output, shape index: {}]
  %s4 = sld [smem:[#allocation0]]
  $region26: #{tpu_custom_call.1} parent=0
    _
  %s6 = ssub.s32 1, %s4
  %s7 = scalar_select 0, %s6, %s4
  $region1: #{tpu_custom_call.1} parent=0
    #allocation2 [shape = 'u8[65536]{0}', space=vmem, size = 0x10000, scoped, tag = 'input window, operand 0, single buffered']
    #allocation3 [shape = 's32[1]{0}', space=sflag, size = 0x4, scoped, tag = 'scoped memory for tpu_custom_call.1']
    #allocation4 [shape = 's32[1]{0}', space=sflag, size = 0x4, scoped, tag = 'scoped memory for tpu_custom_call.1']
    #allocation5 [shape = 'u8[65536]{0}', space=vmem, size = 0x10000, scoped, tag = 'output window, operand 0, single buffered']
    %8 = vsyncpa [#allocation3], 0
    %9 = vsyncpa [#allocation4], 0
    // Predicated region
    $region2: #{tpu_custom_call.1} parent=1 // pred_check
      _
    $region3: #{tpu_custom_call.1} parent=1 // pred_check_branch
      %11 = sbr.rel (0) target = $region5
    $region4: #{tpu_custom_call.1} parent=1 // pred_region
      %s13 = ssub.s32 2048, 2048
      %14 = vsyncadd [#allocation3], %s13
      %s15 = sshll.u32 [#allocation2], 4
      %s16 = int_to_ptr.vmem [resolvable:$true] %s15
      %21 = dma.hbm_to_vmem [thread:$0]  %s0, 2048, %s16, [#allocation3], 256, 256, 16
    $region5: #{tpu_custom_call.1} parent=1 // pred_fallthru
      _
    // Predicated region
    $region6: #{tpu_custom_call.1} parent=1 // pred_check
      _
    $region7: #{tpu_custom_call.1} parent=1 // pred_check_branch
      %23 = sbr.rel (0) target = $region9
    $region8: #{tpu_custom_call.1} parent=1 // pred_region
      _
    $region9: #{tpu_custom_call.1} parent=1 // pred_fallthru
      _
    // Predicated region
    $region10: #{tpu_custom_call.1} parent=1 // pred_check
      _
    $region11: #{tpu_custom_call.1} parent=1 // pred_check_branch
      %25 = sbr.rel (0) target = $region13
    $region12: #{tpu_custom_call.1} parent=1 // pred_region
      _
    $region13: #{tpu_custom_call.1} parent=1 // pred_fallthru
      _
    // Predicated region
    $region14: #{tpu_custom_call.1} parent=1 // pred_check
      _
    $region15: #{tpu_custom_call.1} parent=1 // pred_check_branch
      %27 = sbr.rel (0) target = $region17
    $region16: #{tpu_custom_call.1} parent=1 // pred_region
      %28 = dma.done [#allocation3], 2048
    $region17: #{tpu_custom_call.1} parent=1 // pred_fallthru
      _
    %v29 = vld [vmem:[#allocation2] sm:$0xff]
    %v30 = vld [vmem:[#allocation2 + $0x8] sm:$0xff]
    %v31 = vld [vmem:[#allocation2 + $0x10] sm:$0xff]
    %v32 = vld [vmem:[#allocation2 + $0x18] sm:$0xff]
    %v33 = vld [vmem:[#allocation2 + $0x20] sm:$0xff]
    %v34 = vld [vmem:[#allocation2 + $0x28] sm:$0xff]
    %v35 = vld [vmem:[#allocation2 + $0x30] sm:$0xff]
    %v36 = vld [vmem:[#allocation2 + $0x38] sm:$0xff]
    %v37 = vld [vmem:[#allocation2 + $0x40] sm:$0xff]
    %v38 = vld [vmem:[#allocation2 + $0x48] sm:$0xff]
    %v39 = vld [vmem:[#allocation2 + $0x50] sm:$0xff]
    %v40 = vld [vmem:[#allocation2 + $0x58] sm:$0xff]
    %v41 = vld [vmem:[#allocation2 + $0x60] sm:$0xff]
    %v42 = vld [vmem:[#allocation2 + $0x68] sm:$0xff]
    %v43 = vld [vmem:[#allocation2 + $0x70] sm:$0xff]
    %v44 = vld [vmem:[#allocation2 + $0x78] sm:$0xff]
    %v45 = vadd.f32 %v29, %v30
    %46 = vadd.xlane.f32.xlu0 %v45
    %v47 = vpop.xlane.xlu0 %46
    %v48 = vadd.f32 %v31, %v32
    %49 = vadd.xlane.f32.xlu0 %v48
    %v50 = vpop.xlane.xlu0 %49
    %v51 = vadd.f32 %v33, %v34
    %52 = vadd.xlane.f32.xlu0 %v51
    %v53 = vpop.xlane.xlu0 %52
    %v54 = vadd.f32 %v35, %v36
    %55 = vadd.xlane.f32.xlu0 %v54
    %v56 = vpop.xlane.xlu0 %55
    %v57 = vadd.f32 %v37, %v38
    %58 = vadd.xlane.f32.xlu0 %v57
    %v59 = vpop.xlane.xlu0 %58
    %v60 = vadd.f32 %v39, %v40
    %61 = vadd.xlane.f32.xlu0 %v60
    %v62 = vpop.xlane.xlu0 %61
    %v63 = vadd.f32 %v41, %v42
    %64 = vadd.xlane.f32.xlu0 %v63
    %v65 = vpop.xlane.xlu0 %64
    %v66 = vadd.f32 %v43, %v44
    %67 = vadd.xlane.f32.xlu0 %v66
    %v68 = vpop.xlane.xlu0 %67
    %v69 = vmul.f32 %v47, 0.00390625
    %v70 = vmul.f32 %v50, 0.00390625
    %v71 = vmul.f32 %v53, 0.00390625
    %v72 = vmul.f32 %v56, 0.00390625
    %v73 = vmul.f32 %v59, 0.00390625
    %v74 = vmul.f32 %v62, 0.00390625
    %v75 = vmul.f32 %v65, 0.00390625
    %v76 = vmul.f32 %v68, 0.00390625
    %v77 = vld [vmem:[%s1] sm:$0xff]
    %v78 = vld [vmem:[%s1 + $0x8] sm:$0xff]
    %v79 = vld [vmem:[%s2] sm:$0xff]
    %v80 = vld [vmem:[%s2 + $0x8] sm:$0xff]
    %v81 = vmul.f32 %v69, %v77
    %v82 = vmul.f32 %v70, %v78
    %v83 = vmul.f32 %v71, %v77
    %v84 = vmul.f32 %v72, %v78
    %v85 = vmul.f32 %v73, %v77
    %v86 = vmul.f32 %v74, %v78
    %v87 = vmul.f32 %v75, %v77
    %v88 = vmul.f32 %v76, %v78
    %vm89 = vcmask 31744
    %v90 = vsel %vm89, %v81, 0.0
    %v91 = vsel %vm89, %v82, 0.0
    %v92 = vadd.f32 %v90, %v91
    %v93 = vrot.slane %v92, 4
    %v94 = vadd.f32 %v92, %v93
    %v95 = vrot.slane %v94, 2
    %v96 = vadd.f32 %v94, %v95
    %v97 = vrot.slane %v96, 1
    %v98 = vadd.f32 %v96, %v97
    %v99 = vsel %vm89, %v83, 0.0
    %v100 = vsel %vm89, %v84, 0.0
    %v101 = vadd.f32 %v99, %v100
    %v102 = vrot.slane %v101, 4
    %v103 = vadd.f32 %v101, %v102
    %v104 = vrot.slane %v103, 2
    %v105 = vadd.f32 %v103, %v104
    %v106 = vrot.slane %v105, 1
    %v107 = vadd.f32 %v105, %v106
    %v108 = vsel %vm89, %v85, 0.0
    %v109 = vsel %vm89, %v86, 0.0
    %v110 = vadd.f32 %v108, %v109
    %v111 = vrot.slane %v110, 4
    %v112 = vadd.f32 %v110, %v111
    %v113 = vrot.slane %v112, 2
    %v114 = vadd.f32 %v112, %v113
    %v115 = vrot.slane %v114, 1
    %v116 = vadd.f32 %v114, %v115
    %v117 = vsel %vm89, %v87, 0.0
    %v118 = vsel %vm89, %v88, 0.0
    %v119 = vadd.f32 %v117, %v118
    %v120 = vrot.slane %v119, 4
    %v121 = vadd.f32 %v119, %v120
    %v122 = vrot.slane %v121, 2
    %v123 = vadd.f32 %v121, %v122
    %v124 = vrot.slane %v123, 1
    %v125 = vadd.f32 %v123, %v124
    %v126 = vmax.f32 %v98, 0.0
    %v127 = vmax.f32 %v107, 0.0
    %v128 = vmax.f32 %v116, 0.0
    %v129 = vmax.f32 %v125, 0.0
    %v130 = vmul.f32 %v126, %v79
    %v131 = vmul.f32 %v126, %v80
    %v132 = vmul.f32 %v127, %v79
    %v133 = vmul.f32 %v127, %v80
    %v134 = vmul.f32 %v128, %v79
    %v135 = vmul.f32 %v128, %v80
    %v136 = vmul.f32 %v129, %v79
    %v137 = vmul.f32 %v129, %v80
    %v138 = vsel %vm89, %v130, 0.0
    %139 = vadd.xlane.f32.xlu0 %v138
    %v140 = vpop.xlane.xlu0 %139
    %v141 = vsel %vm89, %v131, 0.0
    %142 = vadd.xlane.f32.xlu0 %v141
    %v143 = vpop.xlane.xlu0 %142
    %v144 = vsel %vm89, %v132, 0.0
    %145 = vadd.xlane.f32.xlu0 %v144
    %v146 = vpop.xlane.xlu0 %145
    %v147 = vsel %vm89, %v133, 0.0
    %148 = vadd.xlane.f32.xlu0 %v147
    %v149 = vpop.xlane.xlu0 %148
    %v150 = vsel %vm89, %v134, 0.0
    %151 = vadd.xlane.f32.xlu0 %v150
    %v152 = vpop.xlane.xlu0 %151
    %v153 = vsel %vm89, %v135, 0.0
    %154 = vadd.xlane.f32.xlu0 %v153
    %v155 = vpop.xlane.xlu0 %154
    %v156 = vsel %vm89, %v136, 0.0
    %157 = vadd.xlane.f32.xlu0 %v156
    %v158 = vpop.xlane.xlu0 %157
    %v159 = vsel %vm89, %v137, 0.0
    %160 = vadd.xlane.f32.xlu0 %v159
    %v161 = vpop.xlane.xlu0 %160
    %v162 = vadd.f32 %v140, 3.0
    %v163 = vadd.f32 %v143, 3.0
    %v164 = vadd.f32 %v146, 3.0
    %v165 = vadd.f32 %v149, 3.0
    %v166 = vadd.f32 %v152, 3.0
    %v167 = vadd.f32 %v155, 3.0
    %v168 = vadd.f32 %v158, 3.0
    %v169 = vadd.f32 %v161, 3.0
    %v170 = vmax.f32 %v162, 0.0
    %v171 = vmax.f32 %v163, 0.0
    %v172 = vmax.f32 %v164, 0.0
    %v173 = vmax.f32 %v165, 0.0
    %v174 = vmax.f32 %v166, 0.0
    %v175 = vmax.f32 %v167, 0.0
    %v176 = vmax.f32 %v168, 0.0
    %v177 = vmax.f32 %v169, 0.0
    %v178 = vmin.f32 %v170, 6.0
    %v179 = vmin.f32 %v171, 6.0
    %v180 = vmin.f32 %v172, 6.0
    %v181 = vmin.f32 %v173, 6.0
    %v182 = vmin.f32 %v174, 6.0
    %v183 = vmin.f32 %v175, 6.0
    %v184 = vmin.f32 %v176, 6.0
    %v185 = vmin.f32 %v177, 6.0
    %v186 = vmul.f32 %v178, 0.16666667
    %v187 = vmul.f32 %v179, 0.16666667
    %v188 = vmul.f32 %v180, 0.16666667
    %v189 = vmul.f32 %v181, 0.16666667
    %v190 = vmul.f32 %v182, 0.16666667
    %v191 = vmul.f32 %v183, 0.16666667
    %v192 = vmul.f32 %v184, 0.16666667
    %v193 = vmul.f32 %v185, 0.16666667
    %v194 = vmul.f32 %v29, %v186
    %v195 = vmul.f32 %v30, %v186
    %v196 = vmul.f32 %v31, %v187
    %v197 = vmul.f32 %v32, %v187
    %v198 = vmul.f32 %v33, %v188
    %v199 = vmul.f32 %v34, %v188
    %v200 = vmul.f32 %v35, %v189
    %v201 = vmul.f32 %v36, %v189
    %v202 = vmul.f32 %v37, %v190
    %v203 = vmul.f32 %v38, %v190
    %v204 = vmul.f32 %v39, %v191
    %v205 = vmul.f32 %v40, %v191
    %v206 = vmul.f32 %v41, %v192
    %v207 = vmul.f32 %v42, %v192
    %v208 = vmul.f32 %v43, %v193
    %v209 = vmul.f32 %v44, %v193
    %210 = vst [vmem:[#allocation5] sm:$0xff] %v194
    %211 = vst [vmem:[#allocation5 + $0x8] sm:$0xff] %v195
    %212 = vst [vmem:[#allocation5 + $0x10] sm:$0xff] %v196
    %213 = vst [vmem:[#allocation5 + $0x18] sm:$0xff] %v197
    %214 = vst [vmem:[#allocation5 + $0x20] sm:$0xff] %v198
    %215 = vst [vmem:[#allocation5 + $0x28] sm:$0xff] %v199
    %216 = vst [vmem:[#allocation5 + $0x30] sm:$0xff] %v200
    %217 = vst [vmem:[#allocation5 + $0x38] sm:$0xff] %v201
    %218 = vst [vmem:[#allocation5 + $0x40] sm:$0xff] %v202
    %219 = vst [vmem:[#allocation5 + $0x48] sm:$0xff] %v203
    %220 = vst [vmem:[#allocation5 + $0x50] sm:$0xff] %v204
    %221 = vst [vmem:[#allocation5 + $0x58] sm:$0xff] %v205
    %222 = vst [vmem:[#allocation5 + $0x60] sm:$0xff] %v206
    %223 = vst [vmem:[#allocation5 + $0x68] sm:$0xff] %v207
    %224 = vst [vmem:[#allocation5 + $0x70] sm:$0xff] %v208
    %225 = vst [vmem:[#allocation5 + $0x78] sm:$0xff] %v209
    // Predicated region
    $region18: #{tpu_custom_call.1} parent=1 // pred_check
      _
    $region19: #{tpu_custom_call.1} parent=1 // pred_check_branch
      %227 = sbr.rel (0) target = $region21
    $region20: #{tpu_custom_call.1} parent=1 // pred_region
      %s229 = ssub.s32 2048, 2048
      %230 = vsyncadd [#allocation4], %s229
      %s231 = sshll.u32 [#allocation5], 4
      %s232 = int_to_ptr.vmem [resolvable:$true] %s231
      %237 = dma.vmem_to_hbm [thread:$0]  %s232, 2048, %s3, [#allocation4], 256, 256, 16
    $region21: #{tpu_custom_call.1} parent=1 // pred_fallthru
      _
    // Predicated region
    $region22: #{tpu_custom_call.1} parent=1 // pred_check
      _
    $region23: #{tpu_custom_call.1} parent=1 // pred_check_branch
      %239 = sbr.rel (0) target = $region25
    $region24: #{tpu_custom_call.1} parent=1 // pred_region
      %240 = dma.done [#allocation4], 2048
    $region25: #{tpu_custom_call.1} parent=1 // pred_fallthru
      _
    %241 = vsyncpa [#allocation3], 1
    %242 = vsyncpa [#allocation4], 1

</llo_original>
